<compile_context>
chip_gen: v5e
topology: v5e:2x2
jax: 0.10.0
libtpu: 0.0.40
codegen_flags: <defaults>
</compile_context>

<pallas_src>
import functools

import jax
import jax.numpy as jnp
from jax.experimental import pallas as pl
from jax.experimental.pallas import tpu as pltpu


# TODO(synk): training-mode Dropout (stochastic masking via pltpu.prng_seed +
# pltpu.stateful_bernoulli) is not implemented; eval mode == identity, as here.

_MiB = 1024 * 1024
_SINGLE_BUFFER_OK = None  # cached capability probe for pl.Buffered(1)


# ----------------------------- kernels ------------------------------------- #

def _kernel_resid(x_ref, w1_ref, b1_ref, w2_ref, b2_ref, o_ref):
    """Specialized path (embedder statically zero): out = x + MLP(x)."""
    x = x_ref[...]
    cdt = w1_ref.dtype
    h1 = jnp.dot(x.astype(cdt), w1_ref[...], preferred_element_type=jnp.float32)
    h1 = jnp.maximum(h1 + b1_ref[...], 0.0)
    h2 = jnp.dot(h1.astype(cdt), w2_ref[...], preferred_element_type=jnp.float32)
    h2 = jnp.maximum(h2 + b2_ref[...], 0.0)
    o_ref[...] = (x.astype(jnp.float32) + h2).astype(o_ref.dtype)


def _kernel_resid_ctx(x_ref, c_ref, w1_ref, b1_ref, w2_ref, b2_ref,
                      we_ref, be_ref, o_ref):
    """General path: out = x + MLP(x) + c @ We + be."""
    x = x_ref[...]
    cdt = w1_ref.dtype
    h1 = jnp.dot(x.astype(cdt), w1_ref[...], preferred_element_type=jnp.float32)
    h1 = jnp.maximum(h1 + b1_ref[...], 0.0)
    h2 = jnp.dot(h1.astype(cdt), w2_ref[...], preferred_element_type=jnp.float32)
    h2 = jnp.maximum(h2 + b2_ref[...], 0.0)
    e = jnp.dot(c_ref[...].astype(cdt), we_ref[...],
                preferred_element_type=jnp.float32) + be_ref[...]
    o_ref[...] = (x.astype(jnp.float32) + h2 + e).astype(o_ref.dtype)


# ----------------------------- helpers -------------------------------------- #

def _round_up(a, m):
    return (a + m - 1) // m * m


def _tpu_vmem_budget():
    """Return (per-core VMEM planning budget, #TensorCores to keep busy)."""
    vmem_cap = 128 * _MiB
    try:
        vmem_cap = int(pltpu.get_tpu_info().vmem_capacity_bytes)
    except Exception:
        pass
    if vmem_cap <= 64 * _MiB:
        # v7x-like: 64 MiB per TensorCore, 2 TCs/chip -> leave headroom for
        # compiler-internal scratch and make sure the grid feeds both cores.
        return 56 * _MiB, 2
    # v5e / v6e: 128 MiB physical VMEM, single TensorCore per chip.
    return 112 * _MiB, 1


def _single_buffer_supported():
    """One-time eager probe: is pipeline_mode=pl.Buffered(1) supported & correct?"""
    global _SINGLE_BUFFER_OK
    if _SINGLE_BUFFER_OK is not None:
        return _SINGLE_BUFFER_OK
    try:
        with jax.ensure_compile_time_eval():
            def k(a_ref, b_ref, o_ref):
                o_ref[...] = a_ref[...] + b_ref[...]

            a = jnp.arange(16 * 128, dtype=jnp.float32).reshape(16, 128)
            b = jnp.arange(8 * 128, dtype=jnp.float32).reshape(8, 128) * 0.5
            out = pl.pallas_call(
                k,
                out_shape=jax.ShapeDtypeStruct((16, 128), jnp.float32),
                grid_spec=pltpu.PrefetchScalarGridSpec(
                    num_scalar_prefetch=0,
                    grid=(2,),
                    in_specs=[pl.BlockSpec((8, 128), lambda i: (i, 0)),
                              pl.BlockSpec((8, 128), lambda i: (0, 0),
                                           pipeline_mode=pl.Buffered(1))],
                    out_specs=pl.BlockSpec((8, 128), lambda i: (i, 0))),
            )(a, b)
            expected = a + jnp.concatenate([b, b], axis=0)
            _SINGLE_BUFFER_OK = bool(jnp.all(out == expected))
    except Exception:
        _SINGLE_BUFFER_OK = False
    return _SINGLE_BUFFER_OK


def _choose_tm(B, H, CTX, in_itemsize, cd_itemsize, with_embedder, pack,
               budget, resident_bytes, num_tc):
    """Pick the batch tile from the VMEM budget; prefer a tile that divides B."""
    # Streaming VMEM bytes per batch row: double-buffered x + out (+ bf16 c),
    # plus f32 intermediates (x_f32, h1, h2, e).
    per_row = 4 * H * in_itemsize
    if with_embedder:
        per_row += 2 * CTX * cd_itemsize
    per_row += 4 * H * 4
    avail = max(budget - resident_bytes, per_row * pack)
    tm = (avail // per_row) // pack * pack
    tm = max(pack, min(tm, 2048))            # diminishing returns past ~2k rows
    tm = min(tm, _round_up(B, pack))
    # Keep every TensorCore busy (v7x megacore): want grid_m >= num_tc.
    if num_tc > 1 and B >= num_tc * pack:
        tm = min(tm, max(pack, (pl.cdiv(B, num_tc) // pack) * pack))
    # Prefer a tile that divides B exactly -> no wrapper-side pad / slice passes.
    best_div = 0
    d = pack
    while d <= tm:
        if B % d == 0:
            best_div = d
        d += pack
    return best_div if best_div else tm


# ----------------------------- wrapper -------------------------------------- #

def context_resid_layer(x, c, w1, b1, w2, b2, we, be, *,
                        has_embedder=True, tm=None,
                        compute_dtype=jnp.bfloat16, alias_x_to_out=False):
    """Pallas forward of ContextResidLayer.

    x: (B, H) activations, c: (B, 256) context.
    Weights are (in, out) == PyTorch weight.T; biases are (out,) or (1, out).

    has_embedder: static Python flag.  Pass False only when the caller knows the
      embedder weights/bias are still zero (as freshly initialized); this drops
      the We DMA, the c stream and one MXU pass.
    alias_x_to_out: opt-in donation of x's buffer to the output.  Only enable if
      x is dead after this call (and donated at the jit boundary); otherwise XLA
      inserts a defensive copy that negates the win.
    """
    B, H = x.shape
    CTX = c.shape[1]
    out_dtype = x.dtype
    in_itemsize = jnp.dtype(out_dtype).itemsize
    cd_itemsize = jnp.dtype(compute_dtype).itemsize
    pack = 8 if in_itemsize >= 4 else 16

    budget, num_tc = _tpu_vmem_budget()
    single_buffer = _single_buffer_supported()
    weight_bufs = 1 if single_buffer else 2

    # Resident (grid-constant) weight/bias bytes.
    resident = 2 * H * H * cd_itemsize + 2 * H * 4
    if has_embedder:
        resident += CTX * H * cd_itemsize + H * 4
    # TODO(synk): if H grows so large that resident W1/W2/We no longer fit the VMEM
    # budget, add a trailing "arbitrary" K/N tiling axis with an f32 accumulator.

    if tm is None:
        tm = _choose_tm(B, H, CTX, in_itemsize, cd_itemsize, has_embedder, pack,
                        budget, weight_bufs * resident, num_tc)
    else:
        tm = max(pack, _round_up(tm, pack))

    grid_m = pl.cdiv(B, tm)
    B_pad = grid_m * tm
    if B_pad != B:
        x = jnp.pad(x, ((0, B_pad - B), (0, 0)))
        if has_embedder:
            c = jnp.pad(c, ((0, B_pad - B), (0, 0)))

    # bf16 MXU operands (weights + the wide c stream); f32 biases.
    w1c = w1.astype(compute_dtype)
    w2c = w2.astype(compute_dtype)
    b1f = jnp.asarray(b1, jnp.float32).reshape(1, H)
    b2f = jnp.asarray(b2, jnp.float32).reshape(1, H)
    if has_embedder:
        # Ideally the caller already supplies bf16 c so this cast fuses upstream.
        c = c.astype(compute_dtype)
        wec = we.astype(compute_dtype)
        bef = jnp.asarray(be, jnp.float32).reshape(1, H)

    wkw = {"pipeline_mode": pl.Buffered(1)} if single_buffer else {}
    const = lambda shape: pl.BlockSpec(shape, lambda i: (0, 0), **wkw)
    # Row streams use the default double-buffering.  TODO(synk): if DMA is still
    # exposed at step boundaries with large tm, try pipeline_mode=pl.Buffered(3) here.
    row_spec = pl.BlockSpec((tm, H), lambda i: (i, 0))

    if has_embedder:
        kernel = _kernel_resid_ctx
        inputs = (x, c, w1c, b1f, w2c, b2f, wec, bef)
        in_specs = [row_spec,
                    pl.BlockSpec((tm, CTX), lambda i: (i, 0)),
                    const((H, H)), const((1, H)),
                    const((H, H)), const((1, H)),
                    const((CTX, H)), const((1, H))]
    else:
        kernel = _kernel_resid
        inputs = (x, w1c, b1f, w2c, b2f)
        in_specs = [row_spec,
                    const((H, H)), const((1, H)),
                    const((H, H)), const((1, H))]

    # Cost hint for the XLA scheduler (small, HBM/latency-dominated call).
    flops = 4 * B_pad * H * H + 4 * B_pad * H
    bytes_accessed = (2 * B_pad * H * in_itemsize          # x + out
                      + 2 * H * H * cd_itemsize + 2 * H * 4)
    if has_embedder:
        flops += 2 * B_pad * CTX * H + B_pad * H
        bytes_accessed += B_pad * CTX * cd_itemsize + CTX * H * cd_itemsize + H * 4
    cost = pl.CostEstimate(flops=flops, transcendentals=0,
                           bytes_accessed=bytes_accessed)

    # VMEM estimate: streaming blocks (double-buffered) + f32 temps + resident weights.
    stream = 4 * tm * H * in_itemsize + 4 * tm * H * 4
    if has_embedder:
        stream += 2 * tm * CTX * cd_itemsize
    vmem_est = stream + weight_bufs * resident
    # Always set the scoped limit explicitly (v5e's default is only 16 MiB); stay
    # inside the per-generation budget.
    vmem_limit = int(min(max(2 * vmem_est, 32 * _MiB), budget))

    compiler_params = pltpu.CompilerParams(
        dimension_semantics=("parallel",),
        vmem_limit_bytes=vmem_limit)

    out = pl.pallas_call(
        kernel,
        out_shape=jax.ShapeDtypeStruct((B_pad, H), out_dtype),
        grid_spec=pltpu.PrefetchScalarGridSpec(
            num_scalar_prefetch=0,
            grid=(grid_m,),
            in_specs=in_specs,
            out_specs=row_spec,
        ),
        compiler_params=compiler_params,
        cost_estimate=cost,
        input_output_aliases=({0: 0} if alias_x_to_out else {}),
    )(*inputs)

    return out[:B] if B_pad != B else out


# ----------------------------- reference ------------------------------------ #

def reference(x, c, w1, b1, w2, b2, we, be, compute_dtype=jnp.bfloat16):
    """Matched-precision JAX reference (bf16 MXU inputs, f32 accumulation)."""
    cd = compute_dtype
    f32 = jnp.float32
    h1 = jnp.maximum(
        jnp.dot(x.astype(cd), w1.astype(cd), preferred_element_type=f32)
        + b1.reshape(1, -1).astype(f32), 0.0)
    h2 = jnp.maximum(
        jnp.dot(h1.astype(cd), w2.astype(cd), preferred_element_type=f32)
        + b2.reshape(1, -1).astype(f32), 0.0)
    e = (jnp.dot(c.astype(cd), we.astype(cd), preferred_element_type=f32)
         + be.reshape(1, -1).astype(f32))
    return (x.astype(f32) + h2 + e).astype(x.dtype)


# ----------------------------- demo / test ----------------------------------- #

if __name__ == "__main__":
    H, CTX = 128, 256
    key = jax.random.PRNGKey(0)
    kx, kc, kw1, kb1, kw2, kb2, kwe, kbe = jax.random.split(key, 8)

    bound = 1.0 / (H ** 0.5)
    # Weights stored as (in, out) = PyTorch weight.T
    w1 = jax.random.uniform(kw1, (H, H), jnp.float32, -bound, bound)
    b1 = jax.random.uniform(kb1, (H,), jnp.float32, -bound, bound)
    w2 = jax.random.uniform(kw2, (H, H), jnp.float32, -bound, bound)
    b2 = jax.random.uniform(kb2, (H,), jnp.float32, -bound, bound)

    # --- case 1: module as initialized (embedder zero) -> specialized path ---
    B = 16
    x = jax.random.normal(kx, (B, H), dtype=jnp.float32)
    c = jax.random.normal(kc, (B, CTX), dtype=jnp.float32)
    we0 = jnp.zeros((CTX, H), jnp.float32)
    be0 = jnp.zeros((H,), jnp.float32)

    ref1 = reference(x, c, w1, b1, w2, b2, we0, be0)
    out1 = jax.block_until_ready(
        context_resid_layer(x, c, w1, b1, w2, b2, we0, be0, has_embedder=False))
    assert out1.shape == (B, H)
    assert jnp.allclose(out1, ref1, atol=1e-2, rtol=1e-2), "mismatch (zero embedder)"

    # --- case 2: nonzero embedder, ragged batch, under jit ---
    B2 = 20
    x2 = jax.random.normal(kx, (B2, H), dtype=jnp.float32)
    c2 = jax.random.normal(kc, (B2, CTX), dtype=jnp.float32)
    bound_e = 1.0 / (CTX ** 0.5)
    we1 = jax.random.uniform(kwe, (CTX, H), jnp.float32, -bound_e, bound_e)
    be1 = jax.random.uniform(kbe, (H,), jnp.float32, -bound_e, bound_e)

    ref2 = reference(x2, c2, w1, b1, w2, b2, we1, be1)
    fwd = jax.jit(functools.partial(context_resid_layer, has_embedder=True))
    out2 = jax.block_until_ready(fwd(x2, c2, w1, b1, w2, b2, we1, be1))
    assert out2.shape == (B2, H)
    assert jnp.allclose(out2, ref2, atol=1e-2, rtol=1e-2), "mismatch (nonzero embedder)"

    # --- case 3: explicit small tile -> multi-step grid loop is exercised ---
    out3 = jax.block_until_ready(
        context_resid_layer(x2, c2, w1, b1, w2, b2, we1, be1,
                            has_embedder=True, tm=8))
    assert jnp.allclose(out3, ref2, atol=1e-2, rtol=1e-2), "mismatch (tm=8)"

    print("KERNEL_OK")
</pallas_src>

<mosaic_0001>
module attributes {stable_mosaic.version = 11 : i64} {
  func.func @k(%arg0: i32, %arg1: memref<8x128xf32, #tpu.memory_space<vmem>>, %arg2: memref<8x128xf32, #tpu.memory_space<vmem>>, %arg3: memref<8x128xf32, #tpu.memory_space<vmem>>) attributes {dimension_semantics = [#tpu.dimension_semantics<arbitrary>], iteration_bounds = array<i64: 2>, scalar_prefetch = 0 : i64, scratch_operands = 0 : i64, tpu.core_type = #tpu.core_type<tc>, window_params = [{transform_indices = @transform_0, window_bounds = array<i64: 8, 128>}, {pipeline_mode = #tpu.pipeline_mode<synchronous>, transform_indices = @transform_1, window_bounds = array<i64: 8, 128>}, {transform_indices = @transform_2, window_bounds = array<i64: 8, 128>}]} {
    %c0 = arith.constant 0 : index
    %c0_0 = arith.constant 0 : index
    %0 = vector.load %arg1[%c0, %c0_0] : memref<8x128xf32, #tpu.memory_space<vmem>>, vector<8x128xf32>
    %c0_1 = arith.constant 0 : index
    %c0_2 = arith.constant 0 : index
    %1 = vector.load %arg2[%c0_1, %c0_2] : memref<8x128xf32, #tpu.memory_space<vmem>>, vector<8x128xf32>
    %2 = arith.addf %0, %1 : vector<8x128xf32>
    %c0_3 = arith.constant 0 : index
    %c0_4 = arith.constant 0 : index
    %3 = vector.load %arg3[%c0_3, %c0_4] : memref<8x128xf32, #tpu.memory_space<vmem>>, vector<8x128xf32>
    tpu.vector_store %arg3[%c0_3, %c0_4], %2 {strides = array<i32>} : memref<8x128xf32, #tpu.memory_space<vmem>>, vector<8x128xf32>,
    return
  }
  func.func @transform_0(%arg0: i32) -> (i32, i32) {
    %c0_i32 = arith.constant 0 : i32
    %c0_i32_0 = arith.constant 0 : i32
    return %arg0, %c0_i32 : i32, i32
  }
  func.func @transform_1(%arg0: i32) -> (i32, i32) {
    %c0_i32 = arith.constant 0 : i32
    %c0_i32_0 = arith.constant 0 : i32
    %c0_i32_1 = arith.constant 0 : i32
    return %c0_i32, %c0_i32_0 : i32, i32
  }
  func.func @transform_2(%arg0: i32) -> (i32, i32) {
    %c0_i32 = arith.constant 0 : i32
    %c0_i32_0 = arith.constant 0 : i32
    return %arg0, %c0_i32 : i32, i32
  }
}

module attributes {stable_mosaic.version = 11 : i64} {
  func.func @_kernel_resid(%arg0: i32, %arg1: memref<16x128xf32, #tpu.memory_space<vmem>>, %arg2: memref<128x128xbf16, #tpu.memory_space<vmem>>, %arg3: memref<1x128xf32, #tpu.memory_space<vmem>>, %arg4: memref<128x128xbf16, #tpu.memory_space<vmem>>, %arg5: memref<1x128xf32, #tpu.memory_space<vmem>>, %arg6: memref<16x128xf32, #tpu.memory_space<vmem>>) attributes {dimension_semantics = [#tpu.dimension_semantics<parallel>], iteration_bounds = array<i64: 1>, scalar_prefetch = 0 : i64, scratch_operands = 0 : i64, tpu.core_type = #tpu.core_type<tc>, window_params = [{transform_indices = @transform_0, window_bounds = array<i64: 16, 128>}, {pipeline_mode = #tpu.pipeline_mode<synchronous>, transform_indices = @transform_1, window_bounds = array<i64: 128, 128>}, {pipeline_mode = #tpu.pipeline_mode<synchronous>, transform_indices = @transform_2, window_bounds = array<i64: 1, 128>}, {pipeline_mode = #tpu.pipeline_mode<synchronous>, transform_indices = @transform_3, window_bounds = array<i64: 128, 128>}, {pipeline_mode = #tpu.pipeline_mode<synchronous>, transform_indices = @transform_4, window_bounds = array<i64: 1, 128>}, {transform_indices = @transform_5, window_bounds = array<i64: 16, 128>}]} {
    %c0 = arith.constant 0 : index
    %c0_0 = arith.constant 0 : index
    %0 = vector.load %arg1[%c0, %c0_0] : memref<16x128xf32, #tpu.memory_space<vmem>>, vector<16x128xf32>
    %1 = arith.truncf %0 : vector<16x128xf32> to vector<16x128xbf16>
    %c0_1 = arith.constant 0 : index
    %c0_2 = arith.constant 0 : index
    %2 = vector.load %arg2[%c0_1, %c0_2] : memref<128x128xbf16, #tpu.memory_space<vmem>>, vector<128x128xbf16>
    %cst = arith.constant dense<0.000000e+00> : vector<16x128xf32>
    %3 = tpu.matmul %1, %2, %cst {dimension_numbers = #tpu.dot_dimension_numbers<[1], [0], [0], [1], [0, 0, 1, 1], [], []>} : vector<16x128xbf16>, vector<128x128xbf16>, vector<16x128xf32> -> vector<16x128xf32>
    %c0_3 = arith.constant 0 : index
    %c0_4 = arith.constant 0 : index
    %4 = vector.load %arg3[%c0_3, %c0_4] : memref<1x128xf32, #tpu.memory_space<vmem>>, vector<1x128xf32>
    %5 = vector.broadcast %4 : vector<1x128xf32> to vector<16x128xf32>
    %6 = arith.addf %3, %5 : vector<16x128xf32>
    %cst_5 = arith.constant 0.000000e+00 : f32
    %7 = vector.broadcast %cst_5 : f32 to vector<16x128xf32>
    %8 = arith.maximumf %6, %7 : vector<16x128xf32>
    %9 = arith.truncf %8 : vector<16x128xf32> to vector<16x128xbf16>
    %c0_6 = arith.constant 0 : index
    %c0_7 = arith.constant 0 : index
    %10 = vector.load %arg4[%c0_6, %c0_7] : memref<128x128xbf16, #tpu.memory_space<vmem>>, vector<128x128xbf16>
    %cst_8 = arith.constant dense<0.000000e+00> : vector<16x128xf32>
    %11 = tpu.matmul %9, %10, %cst_8 {dimension_numbers = #tpu.dot_dimension_numbers<[1], [0], [0], [1], [0, 0, 1, 1], [], []>} : vector<16x128xbf16>, vector<128x128xbf16>, vector<16x128xf32> -> vector<16x128xf32>
    %c0_9 = arith.constant 0 : index
    %c0_10 = arith.constant 0 : index
    %12 = vector.load %arg5[%c0_9, %c0_10] : memref<1x128xf32, #tpu.memory_space<vmem>>, vector<1x128xf32>
    %13 = vector.broadcast %12 : vector<1x128xf32> to vector<16x128xf32>
    %14 = arith.addf %11, %13 : vector<16x128xf32>
    %cst_11 = arith.constant 0.000000e+00 : f32
    %15 = vector.broadcast %cst_11 : f32 to vector<16x128xf32>
    %16 = arith.maximumf %14, %15 : vector<16x128xf32>
    %17 = arith.addf %0, %16 : vector<16x128xf32>
    %c0_12 = arith.constant 0 : index
    %c0_13 = arith.constant 0 : index
    %18 = vector.load %arg6[%c0_12, %c0_13] : memref<16x128xf32, #tpu.memory_space<vmem>>, vector<16x128xf32>
    tpu.vector_store %arg6[%c0_12, %c0_13], %17 {strides = array<i32>} : memref<16x128xf32, #tpu.memory_space<vmem>>, vector<16x128xf32>,
    return
  }
  func.func @transform_0(%arg0: i32) -> (i32, i32) {
    %c0_i32 = arith.constant 0 : i32
    %c0_i32_0 = arith.constant 0 : i32
    return %arg0, %c0_i32 : i32, i32
  }
  func.func @transform_1(%arg0: i32) -> (i32, i32) {
    %c0_i32 = arith.constant 0 : i32
    %c0_i32_0 = arith.constant 0 : i32
    %c0_i32_1 = arith.constant 0 : i32
    return %c0_i32, %c0_i32_0 : i32, i32
  }
  func.func @transform_2(%arg0: i32) -> (i32, i32) {
    %c0_i32 = arith.constant 0 : i32
    %c0_i32_0 = arith.constant 0 : i32
    %c0_i32_1 = arith.constant 0 : i32
    return %c0_i32, %c0_i32_0 : i32, i32
  }
  func.func @transform_3(%arg0: i32) -> (i32, i32) {
    %c0_i32 = arith.constant 0 : i32
    %c0_i32_0 = arith.constant 0 : i32
    %c0_i32_1 = arith.constant 0 : i32
    return %c0_i32, %c0_i32_0 : i32, i32
  }
  func.func @transform_4(%arg0: i32) -> (i32, i32) {
    %c0_i32 = arith.constant 0 : i32
    %c0_i32_0 = arith.constant 0 : i32
    %c0_i32_1 = arith.constant 0 : i32
    return %c0_i32, %c0_i32_0 : i32, i32
  }
  func.func @transform_5(%arg0: i32) -> (i32, i32) {
    %c0_i32 = arith.constant 0 : i32
    %c0_i32_0 = arith.constant 0 : i32
    return %arg0, %c0_i32 : i32, i32
  }
}

</mosaic_0001>

<llo_original>
// kernel: tpu_custom_call.1
$region0: #{tpu_custom_call.1}
  #allocation0 [shape = 'u32[]', space=smem, size = 0x4, offset = 0x4, fixed_abs, tag = 'smem constant byte address 0x4 - core index']
  #allocation1 [shape = 'u32[72,128]{1,0:T(1,128)}', space=vmem, size = 0x9000, scoped, tag = 'internal scratch']
  %s0 = inlined_call_operand.hbm [shape: f32[16,128], index: 0, kind: input, shape index: {}]
  %s1 = inlined_call_operand.hbm [shape: f32[8,128], index: 1, kind: input, shape index: {}]
  %s2 = inlined_call_operand.hbm [shape: f32[16,128], index: 2, kind: output, shape index: {}]
  %s3 = sld [smem:[#allocation0]]
  $region49: #{tpu_custom_call.1} parent=0
    _
  %s5 = ssub.s32 1, %s3
  %s6 = scalar_select 0, %s5, %s3
  $region1: #{tpu_custom_call.1} parent=0
    #allocation2 [shape = 'u8[8192]{0}', space=vmem, size = 0x2000, scoped, tag = 'input window, operand 0']
    #allocation3 [shape = 's32[2]{0}', space=sflag, size = 0x8, scoped, tag = 'scoped memory for tpu_custom_call.1']
    #allocation4 [shape = 's32[2]{0}', space=sflag, size = 0x8, scoped, tag = 'scoped memory for tpu_custom_call.1']
    #allocation5 [shape = 'u8[4096]{0}', space=vmem, size = 0x1000, scoped, tag = 'input window, operand 1, single buffered']
    #allocation6 [shape = 's32[1]{0}', space=sflag, size = 0x4, scoped, tag = 'scoped memory for tpu_custom_call.1']
    #allocation7 [shape = 'u8[8192]{0}', space=vmem, size = 0x2000, scoped, tag = 'output window, operand 0']
    %7 = vsyncpa [#allocation3], 0
    %s8 = scalar_lea.sflag [#allocation3], 1
    %9 = vsyncpa %s8, 0
    %10 = vsyncpa [#allocation6], 0
    %11 = vsyncpa [#allocation4], 0
    %s12 = scalar_lea.sflag [#allocation4], 1
    %13 = vsyncpa %s12, 0
    loop: start=0, step=1, limit=4
    $region2: #{tpu_custom_call.1} parent=1 // loop_pre_header
      _
    $region3: #{tpu_custom_call.1} parent=1 // loop_header
      %s15 = sphi 0, %s19
      %p16 = scmp.ge.s32.totalorder %s15, 4
      %s25 = sphi 0, %s27
      %s28 = sphi 0, %s25
      %s29 = sphi 0, %s28
      %s45 = sphi 0, %s29
      %s49 = sphi 0, %s49
      %s51 = sphi 0, %s49
      %s52 = sphi 0, %s51
      %s66 = sphi 0, %s52
      %s72 = sphi 0, %s74
      %s75 = sphi 0, %s72
      %s76 = sphi 0, %s75
      %s92 = sphi 0, %s76
    $region4: #{tpu_custom_call.1} parent=1 // loop_header_branch
      %18 = sbr.rel (%p16) target = $region8
    $region5: #{tpu_custom_call.1} parent=1 // loop_body
      %s20 = ssub.s32 %s15, 1
      %s21 = ssub.s32 %s15, 2
      %s22 = sadd.s32 %s15, 1
      %s23 = ssub.s32 %s15, %s22
      %p24 = scmp.eq.s32.totalorder %s23, 0
      %s26 = sadd.s32 %s25, 1
      %s27 = scalar_select %p24, %s25, %s26
      %p30 = pneg %p24
      %p31 = scmp.eq.s32.totalorder %s15, 1
      %p32 = por %p30, %p31
      %p33 = scmp.ne.s32.totalorder %s25, %s28
      %p34 = scmp.eq.s32.totalorder %s15, 0
      %p35 = por %p33, %p34
      %p36 = scmp.ne.s32.totalorder %s25, %s28
      %p37 = scmp.eq.s32.totalorder %s20, 1
      %p38 = por %p36, %p37
      %p39 = scmp.ne.s32.totalorder %s28, %s29
      %p40 = scmp.eq.s32.totalorder %s20, 0
      %p41 = por %p39, %p40
      %p42 = scmp.ne.s32.totalorder %s28, %s29
      %p43 = scmp.eq.s32.totalorder %s21, 1
      %p44 = por %p42, %p43
      %p46 = scmp.ne.s32.totalorder %s29, %s45
      %p47 = scmp.eq.s32.totalorder %s21, 0
      %p48 = por %p46, %p47
      %s50 = sadd.s32 %s49, 1
      %p53 = scmp.eq.s32.totalorder %s15, 1
      %p54 = scmp.ne.s32.totalorder %s49, %s51
      %p55 = scmp.eq.s32.totalorder %s15, 0
      %p56 = por %p54, %p55
      %p57 = scmp.ne.s32.totalorder %s49, %s51
      %p58 = scmp.eq.s32.totalorder %s20, 1
      %p59 = por %p57, %p58
      %p60 = scmp.ne.s32.totalorder %s51, %s52
      %p61 = scmp.eq.s32.totalorder %s20, 0
      %p62 = por %p60, %p61
      %p63 = scmp.ne.s32.totalorder %s51, %s52
      %p64 = scmp.eq.s32.totalorder %s21, 1
      %p65 = por %p63, %p64
      %p67 = scmp.ne.s32.totalorder %s52, %s66
      %p68 = scmp.eq.s32.totalorder %s21, 0
      %p69 = por %p67, %p68
      %s70 = ssub.s32 %s15, %s22
      %p71 = scmp.eq.s32.totalorder %s70, 0
      %s73 = sadd.s32 %s72, 1
      %s74 = scalar_select %p71, %s72, %s73
      %p77 = pneg %p71
      %p78 = scmp.eq.s32.totalorder %s15, 1
      %p79 = por %p77, %p78
      %p80 = scmp.ne.s32.totalorder %s72, %s75
      %p81 = scmp.eq.s32.totalorder %s15, 0
      %p82 = por %p80, %p81
      %p83 = scmp.ne.s32.totalorder %s72, %s75
      %p84 = scmp.eq.s32.totalorder %s20, 1
      %p85 = por %p83, %p84
      %p86 = scmp.ne.s32.totalorder %s75, %s76
      %p87 = scmp.eq.s32.totalorder %s20, 0
      %p88 = por %p86, %p87
      %p89 = scmp.ne.s32.totalorder %s75, %s76
      %p90 = scmp.eq.s32.totalorder %s21, 1
      %p91 = por %p89, %p90
      %p93 = scmp.ne.s32.totalorder %s76, %s92
      %p94 = scmp.eq.s32.totalorder %s21, 0
      %p95 = por %p93, %p94
      %p96 = scmp.le.s32.totalorder 1, %s15
      %p97 = scmp.lt.s32.totalorder %s15, 3
      %p98 = pnand %p96, %p97
      %p99 = pneg %p98
      // Predicated region
      $region9: #{tpu_custom_call.1} parent=5 // pred_check
        _
      $region10: #{tpu_custom_call.1} parent=5 // pred_check_branch
        %101 = sbr.rel (%p98) target = $region12
      $region11: #{tpu_custom_call.1} parent=5 // pred_region
        %s102 = ssub.s32 %s15, 1
        // Predicated region
        $region13: #{tpu_custom_call.1} parent=11 // pred_check
          %p103 = pneg %p62
        $region14: #{tpu_custom_call.1} parent=11 // pred_check_branch
          %105 = sbr.rel (%p103) target = $region16
        $region15: #{tpu_custom_call.1} parent=11 // pred_region
          %107 = vsyncadd [#allocation6], 0
          %s109 = sshll.u32 %s1, 4
          %s110 = int_to_ptr.hbm [resolvable:$true] %s109
          %s111 = sshll.u32 [#allocation5], 4
          %s112 = int_to_ptr.vmem [resolvable:$true] %s111
          %114 = dma.hbm_to_vmem [thread:$0]  %s110, 128, %s112, [#allocation6]
        $region16: #{tpu_custom_call.1} parent=11 // pred_fallthru
          _
      $region12: #{tpu_custom_call.1} parent=5 // pred_fallthru
        _
      %p115 = scmp.lt.s32.totalorder %s15, 2
      // Predicated region
      $region17: #{tpu_custom_call.1} parent=5 // pred_check
        %p116 = pneg %p115
      $region18: #{tpu_custom_call.1} parent=5 // pred_check_branch
        %118 = sbr.rel (%p116) target = $region20
      $region19: #{tpu_custom_call.1} parent=5 // pred_region
        // Predicated region
        $region21: #{tpu_custom_call.1} parent=19 // pred_check
          %p119 = pneg %p35
        $region22: #{tpu_custom_call.1} parent=19 // pred_check_branch
          %121 = sbr.rel (%p119) target = $region24
        $region23: #{tpu_custom_call.1} parent=19 // pred_region
          %s122 = sand.u32 %s25, 1
          %s123 = scalar_lea.sflag [#allocation3], %s122
          %s124 = sand.u32 %s25, 1
          %s125 = smul.addr %s124, 8
          %s126 = scalar_lea.vmem [#allocation2], %s125
          %128 = vsyncadd %s123, 0
          %s129 = smul.addr %s15, 8
          %s130 = scalar_lea.hbm %s0, %s129
          %s132 = sshll.u32 %s130, 4
          %s133 = int_to_ptr.hbm [resolvable:$true] %s132
          %s134 = sshll.u32 %s126, 4
          %s135 = int_to_ptr.vmem [resolvable:$true] %s134
          %137 = dma.hbm_to_vmem [thread:$0]  %s133, 128, %s135, %s123
        $region24: #{tpu_custom_call.1} parent=19 // pred_fallthru
          _
      $region20: #{tpu_custom_call.1} parent=5 // pred_fallthru
        _
      %p138 = scmp.le.s32.totalorder 1, %s15
      %p139 = scmp.lt.s32.totalorder %s15, 3
      %p140 = pnand %p138, %p139
      %p141 = pneg %p140
      // Predicated region
      $region25: #{tpu_custom_call.1} parent=5 // pred_check
        _
      $region26: #{tpu_custom_call.1} parent=5 // pred_check_branch
        %143 = sbr.rel (%p140) target = $region28
      $region27: #{tpu_custom_call.1} parent=5 // pred_region
        %s144 = ssub.s32 %s15, 1
        %s145 = sand.u32 %s28, 1
        %s146 = scalar_lea.sflag [#allocation3], %s145
        %s147 = sand.u32 %s28, 1
        %s148 = smul.addr %s147, 8
        %s149 = scalar_lea.vmem [#allocation2], %s148
        // Predicated region
        $region29: #{tpu_custom_call.1} parent=27 // pred_check
          %p150 = pneg %p41
        $region30: #{tpu_custom_call.1} parent=27 // pred_check_branch
          %152 = sbr.rel (%p150) target = $region32
        $region31: #{tpu_custom_call.1} parent=27 // pred_region
          %154 = dma.done %s146, 128
        $region32: #{tpu_custom_call.1} parent=27 // pred_fallthru
          _
        // Predicated region
        $region33: #{tpu_custom_call.1} parent=27 // pred_check
          %p155 = pneg %p62
        $region34: #{tpu_custom_call.1} parent=27 // pred_check_branch
          %157 = sbr.rel (%p155) target = $region36
        $region35: #{tpu_custom_call.1} parent=27 // pred_region
          %159 = dma.done [#allocation6], 128
        $region36: #{tpu_custom_call.1} parent=27 // pred_fallthru
          _
        %s160 = sand.u32 %s28, 1
        %s161 = scalar_lea.sflag [#allocation3], %s160
        %s162 = sand.u32 %s28, 1
        %s163 = smul.addr %s162, 8
        %s164 = scalar_lea.vmem [#allocation2], %s163
        %p165 = pneg %p41
        %p166 = pneg %p38
        %p167 = pneg %p62
        %p168 = pneg %p59
        %p169 = pneg %p88
        %p170 = pneg %p85
        %s171 = sand.u32 %s75, 1
        %s172 = scalar_lea.sflag [#allocation4], %s171
        %s173 = sand.u32 %s75, 1
        %s174 = smul.addr %s173, 8
        %s175 = scalar_lea.vmem [#allocation7], %s174
        %v176 = vld [vmem:[%s149] sm:$0xff]
        %v177 = vld [vmem:[#allocation5] sm:$0xff]
        %v178 = vadd.f32 %v176, %v177
        %179 = vst [vmem:[%s175] sm:$0xff] %v178
        %s180 = sand.u32 %s75, 1
        %s181 = scalar_lea.sflag [#allocation4], %s180
        %s182 = sand.u32 %s75, 1
        %s183 = smul.addr %s182, 8
        %s184 = scalar_lea.vmem [#allocation7], %s183
        // Predicated region
        $region37: #{tpu_custom_call.1} parent=27 // pred_check
          %p185 = pneg %p85
        $region38: #{tpu_custom_call.1} parent=27 // pred_check_branch
          %187 = sbr.rel (%p185) target = $region40
        $region39: #{tpu_custom_call.1} parent=27 // pred_region
          %189 = vsyncadd %s181, 0
          %s190 = smul.addr %s20, 8
          %s191 = scalar_lea.hbm %s2, %s190
          %s193 = sshll.u32 %s184, 4
          %s194 = int_to_ptr.vmem [resolvable:$true] %s193
          %s195 = sshll.u32 %s191, 4
          %s196 = int_to_ptr.hbm [resolvable:$true] %s195
          %198 = dma.vmem_to_hbm [thread:$0]  %s194, 128, %s196, %s181
        $region40: #{tpu_custom_call.1} parent=27 // pred_fallthru
          _
      $region28: #{tpu_custom_call.1} parent=5 // pred_fallthru
        _
      %p199 = scmp.le.s32.totalorder 2, %s15
      // Predicated region
      $region41: #{tpu_custom_call.1} parent=5 // pred_check
        %p200 = pneg %p199
      $region42: #{tpu_custom_call.1} parent=5 // pred_check_branch
        %202 = sbr.rel (%p200) target = $region44
      $region43: #{tpu_custom_call.1} parent=5 // pred_region
        %s203 = ssub.s32 %s15, 2
        // Predicated region
        $region45: #{tpu_custom_call.1} parent=43 // pred_check
          %p204 = pneg %p91
        $region46: #{tpu_custom_call.1} parent=43 // pred_check_branch
          %206 = sbr.rel (%p204) target = $region48
        $region47: #{tpu_custom_call.1} parent=43 // pred_region
          %s207 = sand.u32 %s76, 1
          %s208 = scalar_lea.sflag [#allocation4], %s207
          %s209 = sand.u32 %s76, 1
          %s210 = smul.addr %s209, 8
          %s211 = scalar_lea.vmem [#allocation7], %s210
          %213 = dma.done %s208, 128
        $region48: #{tpu_custom_call.1} parent=43 // pred_fallthru
          _
      $region44: #{tpu_custom_call.1} parent=5 // pred_fallthru
        _
    $region6: #{tpu_custom_call.1} parent=1 // loop_footer
      %s19 = sadd.s32 1, %s15
    $region7: #{tpu_custom_call.1} parent=1 // loop_footer_branch
      %14 = sbr.rel target = $region3
    $region8: #{tpu_custom_call.1} parent=1 // loop_exit
      _
    %214 = vsyncpa [#allocation3], 1
    %s215 = scalar_lea.sflag [#allocation3], 1
    %216 = vsyncpa %s215, 1
    %217 = vsyncpa [#allocation6], 1
    %218 = vsyncpa [#allocation4], 1
    %s219 = scalar_lea.sflag [#allocation4], 1
    %220 = vsyncpa %s219, 1

// kernel: tpu_custom_call.1
$region0: #{tpu_custom_call.1}
  #allocation0 [shape = 'u32[]', space=smem, size = 0x4, offset = 0x4, fixed_abs, tag = 'smem constant byte address 0x4 - core index']
  #allocation1 [shape = 'u32[72,128]{1,0:T(1,128)}', space=vmem, size = 0x9000, scoped, tag = 'internal scratch']
  %s0 = inlined_call_operand.hbm [shape: f32[16,128], index: 0, kind: input, shape index: {}]
  %s1 = inlined_call_operand.hbm [shape: bf16[128,128], index: 1, kind: input, shape index: {}]
  %s2 = inlined_call_operand.vmem [shape: f32[1,128], index: 2, kind: input, shape index: {}]
  %s3 = inlined_call_operand.hbm [shape: bf16[128,128], index: 3, kind: input, shape index: {}]
  %s4 = inlined_call_operand.vmem [shape: f32[1,128], index: 4, kind: input, shape index: {}]
  %s5 = inlined_call_operand.hbm [shape: f32[16,128], index: 5, kind: output, shape index: {}]
  %s6 = sld [smem:[#allocation0]]
  $region42: #{tpu_custom_call.1} parent=0
    _
  %s8 = ssub.s32 1, %s6
  %s9 = scalar_select 0, %s8, %s6
  $region1: #{tpu_custom_call.1} parent=0
    #allocation2 [shape = 'u8[8192]{0}', space=vmem, size = 0x2000, scoped, tag = 'input window, operand 0, single buffered']
    #allocation3 [shape = 's32[1]{0}', space=sflag, size = 0x4, scoped, tag = 'scoped memory for tpu_custom_call.1']
    #allocation4 [shape = 's32[1]{0}', space=sflag, size = 0x4, scoped, tag = 'scoped memory for tpu_custom_call.1']
    #allocation5 [shape = 'u8[32768]{0}', space=vmem, size = 0x8000, scoped, tag = 'input window, operand 1, single buffered']
    #allocation6 [shape = 's32[1]{0}', space=sflag, size = 0x4, scoped, tag = 'scoped memory for tpu_custom_call.1']
    #allocation7 [shape = 'u8[32768]{0}', space=vmem, size = 0x8000, scoped, tag = 'input window, operand 3, single buffered']
    #allocation8 [shape = 'u8[8192]{0}', space=vmem, size = 0x2000, scoped, tag = 'output window, operand 0, single buffered']
    %10 = vsyncpa [#allocation3], 0
    %11 = vsyncpa [#allocation6], 0
    %12 = vsyncpa [#allocation4], 0
    // Predicated region
    $region2: #{tpu_custom_call.1} parent=1 // pred_check
      _
    $region3: #{tpu_custom_call.1} parent=1 // pred_check_branch
      %14 = sbr.rel (0) target = $region5
    $region4: #{tpu_custom_call.1} parent=1 // pred_region
      %16 = vsyncadd [#allocation3], 0
      %s17 = sshll.u32 %s0, 4
      %s18 = int_to_ptr.hbm [resolvable:$true] %s17
      %s19 = sshll.u32 [#allocation2], 4
      %s20 = int_to_ptr.vmem [resolvable:$true] %s19
      %25 = dma.hbm_to_vmem [thread:$0]  %s18, 256, %s20, [#allocation3], 128, 128, 8
    $region5: #{tpu_custom_call.1} parent=1 // pred_fallthru
      _
    // Predicated region
    $region6: #{tpu_custom_call.1} parent=1 // pred_check
      _
    $region7: #{tpu_custom_call.1} parent=1 // pred_check_branch
      %27 = sbr.rel (0) target = $region9
    $region8: #{tpu_custom_call.1} parent=1 // pred_region
      %29 = vsyncadd [#allocation6], 0
      %s30 = sshll.u32 %s1, 4
      %s31 = int_to_ptr.hbm [resolvable:$true] %s30
      %s32 = sshll.u32 [#allocation5], 4
      %s33 = int_to_ptr.vmem [resolvable:$true] %s32
      %38 = dma.hbm_to_vmem [thread:$0]  %s31, 1024, %s33, [#allocation6], 64, 64, 4
    $region9: #{tpu_custom_call.1} parent=1 // pred_fallthru
      _
    // Predicated region
    $region10: #{tpu_custom_call.1} parent=1 // pred_check
      _
    $region11: #{tpu_custom_call.1} parent=1 // pred_check_branch
      %40 = sbr.rel (0) target = $region13
    $region12: #{tpu_custom_call.1} parent=1 // pred_region
      _
    $region13: #{tpu_custom_call.1} parent=1 // pred_fallthru
      _
    // Predicated region
    $region14: #{tpu_custom_call.1} parent=1 // pred_check
      _
    $region15: #{tpu_custom_call.1} parent=1 // pred_check_branch
      %42 = sbr.rel (0) target = $region17
    $region16: #{tpu_custom_call.1} parent=1 // pred_region
      %44 = vsyncadd [#allocation6], 0
      %s45 = sshll.u32 %s3, 4
      %s46 = int_to_ptr.hbm [resolvable:$true] %s45
      %s47 = sshll.u32 [#allocation7], 4
      %s48 = int_to_ptr.vmem [resolvable:$true] %s47
      %53 = dma.hbm_to_vmem [thread:$0]  %s46, 1024, %s48, [#allocation6], 64, 64, 4
    $region17: #{tpu_custom_call.1} parent=1 // pred_fallthru
      _
    // Predicated region
    $region18: #{tpu_custom_call.1} parent=1 // pred_check
      _
    $region19: #{tpu_custom_call.1} parent=1 // pred_check_branch
      %55 = sbr.rel (0) target = $region21
    $region20: #{tpu_custom_call.1} parent=1 // pred_region
      _
    $region21: #{tpu_custom_call.1} parent=1 // pred_fallthru
      _
    // Predicated region
    $region22: #{tpu_custom_call.1} parent=1 // pred_check
      _
    $region23: #{tpu_custom_call.1} parent=1 // pred_check_branch
      %57 = sbr.rel (0) target = $region25
    $region24: #{tpu_custom_call.1} parent=1 // pred_region
      %59 = dma.done [#allocation3], 256
    $region25: #{tpu_custom_call.1} parent=1 // pred_fallthru
      _
    // Predicated region
    $region26: #{tpu_custom_call.1} parent=1 // pred_check
      _
    $region27: #{tpu_custom_call.1} parent=1 // pred_check_branch
      %61 = sbr.rel (0) target = $region29
    $region28: #{tpu_custom_call.1} parent=1 // pred_region
      %63 = dma.done [#allocation6], 1024
    $region29: #{tpu_custom_call.1} parent=1 // pred_fallthru
      _
    // Predicated region
    $region30: #{tpu_custom_call.1} parent=1 // pred_check
      _
    $region31: #{tpu_custom_call.1} parent=1 // pred_check_branch
      %65 = sbr.rel (0) target = $region33
    $region32: #{tpu_custom_call.1} parent=1 // pred_region
      %67 = dma.done [#allocation6], 1024
    $region33: #{tpu_custom_call.1} parent=1 // pred_fallthru
      _
    %v68 = vld [vmem:[#allocation2] sm:$0xff]
    %v69 = vld [vmem:[#allocation2 + $0x8] sm:$0xff]
    %v70 = vpack.c.bf16 %v69, %v68
    %v71 = vld [vmem:[#allocation5] sm:$0xf]
    %v72 = vld [vmem:[#allocation5 + $0x4] sm:$0xf]
    %v73 = vld [vmem:[#allocation5 + $0x8] sm:$0xf]
    %v74 = vld [vmem:[#allocation5 + $0xc] sm:$0xf]
    %v75 = vld [vmem:[#allocation5 + $0x10] sm:$0xf]
    %v76 = vld [vmem:[#allocation5 + $0x14] sm:$0xf]
    %v77 = vld [vmem:[#allocation5 + $0x18] sm:$0xf]
    %v78 = vld [vmem:[#allocation5 + $0x1c] sm:$0xf]
    %v79 = vld [vmem:[#allocation5 + $0x20] sm:$0xf]
    %v80 = vld [vmem:[#allocation5 + $0x24] sm:$0xf]
    %v81 = vld [vmem:[#allocation5 + $0x28] sm:$0xf]
    %v82 = vld [vmem:[#allocation5 + $0x2c] sm:$0xf]
    %v83 = vld [vmem:[#allocation5 + $0x30] sm:$0xf]
    %v84 = vld [vmem:[#allocation5 + $0x34] sm:$0xf]
    %v85 = vld [vmem:[#allocation5 + $0x38] sm:$0xf]
    %v86 = vld [vmem:[#allocation5 + $0x3c] sm:$0xf]
    %v87 = vld [vmem:[%s2] sm:$0x1]
    %v89 = vperm.slane %v87, 0
    %v107 = vunpack.c.l.b16 %v71
    %v108 = vunpack.c.l.b16 %v72
    %v109 = vunpack.c.l.b16 %v73
    %v110 = vunpack.c.l.b16 %v74
    %v111 = vunpack.c.l.b16 %v75
    %v112 = vunpack.c.l.b16 %v76
    %v113 = vunpack.c.l.b16 %v77
    %v114 = vunpack.c.l.b16 %v78
    %v115 = vunpack.c.l.b16 %v79
    %v116 = vunpack.c.l.b16 %v80
    %v117 = vunpack.c.l.b16 %v81
    %v118 = vunpack.c.l.b16 %v82
    %v119 = vunpack.c.l.b16 %v83
    %v120 = vunpack.c.l.b16 %v84
    %v121 = vunpack.c.l.b16 %v85
    %v122 = vunpack.c.l.b16 %v86
    %v123 = vpack.c.b16 %v108, %v107
    %v124 = vpack.c.b16 %v110, %v109
    %v125 = vpack.c.b16 %v112, %v111
    %v126 = vpack.c.b16 %v114, %v113
    %v127 = vpack.c.b16 %v116, %v115
    %v128 = vpack.c.b16 %v118, %v117
    %v129 = vpack.c.b16 %v120, %v119
    %v130 = vpack.c.b16 %v122, %v121
    %139 = vmatpush.bf16.msra.mxu0 %v130
    %140 = vmatpush.bf16.msra.mxu0 %v129
    %141 = vmatpush.bf16.msra.mxu0 %v128
    %142 = vmatpush.bf16.msra.mxu0 %v127
    %143 = vmatpush.bf16.msra.mxu0 %v126
    %144 = vmatpush.bf16.msra.mxu0 %v125
    %145 = vmatpush.bf16.msra.mxu0 %v124
    %146 = vmatpush.bf16.msra.mxu0 %v123
    %147 = vmatmul.bf16.gmra.mxu0 %v70
    %v148 = vpop.f32.mrf.mxu0
    %v149 = vadd.f32 %v89, %v148
    %v150 = vpop.f32.mrf.mxu0
    %v151 = vadd.f32 %v89, %v150
    %152 = vdwg.mxu0
    %v153 = vmax.f32 %v149, 0.0
    %v154 = vmax.f32 %v151, 0.0
    %v155 = vpack.c.bf16 %v154, %v153
    %v156 = vld [vmem:[#allocation7] sm:$0xf]
    %v157 = vld [vmem:[#allocation7 + $0x4] sm:$0xf]
    %v158 = vld [vmem:[#allocation7 + $0x8] sm:$0xf]
    %v159 = vld [vmem:[#allocation7 + $0xc] sm:$0xf]
    %v160 = vld [vmem:[#allocation7 + $0x10] sm:$0xf]
    %v161 = vld [vmem:[#allocation7 + $0x14] sm:$0xf]
    %v162 = vld [vmem:[#allocation7 + $0x18] sm:$0xf]
    %v163 = vld [vmem:[#allocation7 + $0x1c] sm:$0xf]
    %v164 = vld [vmem:[#allocation7 + $0x20] sm:$0xf]
    %v165 = vld [vmem:[#allocation7 + $0x24] sm:$0xf]
    %v166 = vld [vmem:[#allocation7 + $0x28] sm:$0xf]
    %v167 = vld [vmem:[#allocation7 + $0x2c] sm:$0xf]
    %v168 = vld [vmem:[#allocation7 + $0x30] sm:$0xf]
    %v169 = vld [vmem:[#allocation7 + $0x34] sm:$0xf]
    %v170 = vld [vmem:[#allocation7 + $0x38] sm:$0xf]
    %v171 = vld [vmem:[#allocation7 + $0x3c] sm:$0xf]
    %v172 = vld [vmem:[%s4] sm:$0x1]
    %v174 = vperm.slane %v172, 0
    %v192 = vunpack.c.l.b16 %v156
    %v193 = vunpack.c.l.b16 %v157
    %v194 = vunpack.c.l.b16 %v158
    %v195 = vunpack.c.l.b16 %v159
    %v196 = vunpack.c.l.b16 %v160
    %v197 = vunpack.c.l.b16 %v161
    %v198 = vunpack.c.l.b16 %v162
    %v199 = vunpack.c.l.b16 %v163
    %v200 = vunpack.c.l.b16 %v164
    %v201 = vunpack.c.l.b16 %v165
    %v202 = vunpack.c.l.b16 %v166
    %v203 = vunpack.c.l.b16 %v167
    %v204 = vunpack.c.l.b16 %v168
    %v205 = vunpack.c.l.b16 %v169
    %v206 = vunpack.c.l.b16 %v170
    %v207 = vunpack.c.l.b16 %v171
    %v208 = vpack.c.b16 %v193, %v192
    %v209 = vpack.c.b16 %v195, %v194
    %v210 = vpack.c.b16 %v197, %v196
    %v211 = vpack.c.b16 %v199, %v198
    %v212 = vpack.c.b16 %v201, %v200
    %v213 = vpack.c.b16 %v203, %v202
    %v214 = vpack.c.b16 %v205, %v204
    %v215 = vpack.c.b16 %v207, %v206
    %224 = vmatpush.bf16.msra.mxu0 %v215
    %225 = vmatpush.bf16.msra.mxu0 %v214
    %226 = vmatpush.bf16.msra.mxu0 %v213
    %227 = vmatpush.bf16.msra.mxu0 %v212
    %228 = vmatpush.bf16.msra.mxu0 %v211
    %229 = vmatpush.bf16.msra.mxu0 %v210
    %230 = vmatpush.bf16.msra.mxu0 %v209
    %231 = vmatpush.bf16.msra.mxu0 %v208
    %232 = vmatmul.bf16.gmra.mxu0 %v155
    %v233 = vpop.f32.mrf.mxu0
    %v234 = vadd.f32 %v174, %v233
    %v235 = vpop.f32.mrf.mxu0
    %v236 = vadd.f32 %v174, %v235
    %237 = vdwg.mxu0
    %v238 = vmax.f32 %v234, 0.0
    %v239 = vmax.f32 %v236, 0.0
    %v240 = vadd.f32 %v68, %v238
    %v241 = vadd.f32 %v69, %v239
    %242 = vst [vmem:[#allocation8] sm:$0xff] %v240
    %243 = vst [vmem:[#allocation8 + $0x8] sm:$0xff] %v241
    // Predicated region
    $region34: #{tpu_custom_call.1} parent=1 // pred_check
      _
    $region35: #{tpu_custom_call.1} parent=1 // pred_check_branch
      %245 = sbr.rel (0) target = $region37
    $region36: #{tpu_custom_call.1} parent=1 // pred_region
      %247 = vsyncadd [#allocation4], 0
      %s248 = sshll.u32 [#allocation8], 4
      %s249 = int_to_ptr.vmem [resolvable:$true] %s248
      %s250 = sshll.u32 %s5, 4
      %s251 = int_to_ptr.hbm [resolvable:$true] %s250
      %256 = dma.vmem_to_hbm [thread:$0]  %s249, 256, %s251, [#allocation4], 128, 128, 8
    $region37: #{tpu_custom_call.1} parent=1 // pred_fallthru
      _
    // Predicated region
    $region38: #{tpu_custom_call.1} parent=1 // pred_check
      _
    $region39: #{tpu_custom_call.1} parent=1 // pred_check_branch
      %258 = sbr.rel (0) target = $region41
    $region40: #{tpu_custom_call.1} parent=1 // pred_region
      %260 = dma.done [#allocation4], 256
    $region41: #{tpu_custom_call.1} parent=1 // pred_fallthru
      _
    %261 = vsyncpa [#allocation3], 1
    %262 = vsyncpa [#allocation6], 1
    %263 = vsyncpa [#allocation4], 1

</llo_original>
